<compile_context>
chip_gen: v5e
topology: v5e:2x2
jax: 0.10.0
libtpu: 0.0.40
codegen_flags: <defaults>
</compile_context>

<pallas_src>
import functools

import jax
import jax.numpy as jnp
from jax.experimental import pallas as pl
from jax.experimental.pallas import tpu as pltpu


# ---------------------------------------------------------------------------
# Setup-time helpers (pure JAX glue, mirrors the PyTorch __init__)
# ---------------------------------------------------------------------------
def compute_partial_repr(input_points, control_points):
    """U(r) = 0.5 * r^2 * log(r^2), with 0*log(0) := 0 (NaN masked to 0)."""
    diff = input_points[:, None, :] - control_points[None, :, :]
    dist = jnp.sum(diff * diff, axis=-1)
    safe = jnp.where(dist > 0, dist, 1.0)
    rep = 0.5 * dist * jnp.log(safe)
    return jnp.where(dist > 0, rep, 0.0)


def build_tps_constants(target_height, target_width, target_control_points):
    """Replicates TPSGridGen.__init__: (inverse_kernel, target_coordinate_repr)."""
    ctrl = target_control_points.astype(jnp.float32)
    N = ctrl.shape[0]

    fk = jnp.zeros((N + 3, N + 3), jnp.float32)
    fk = fk.at[:N, :N].set(compute_partial_repr(ctrl, ctrl))
    fk = fk.at[:N, N].set(1.0)          # column -3
    fk = fk.at[N, :N].set(1.0)          # row    -3
    fk = fk.at[:N, N + 1:].set(ctrl)    # columns -2:
    fk = fk.at[N + 1:, :N].set(ctrl.T)  # rows    -2:
    # Mirrors torch.inverse in the module (solve would be better conditioned).
    inverse_kernel = jnp.linalg.inv(fk)

    HW = target_height * target_width
    yy, xx = jnp.meshgrid(jnp.arange(target_height), jnp.arange(target_width),
                          indexing="ij")
    x = xx.reshape(HW, 1).astype(jnp.float32) + 0.5
    y = yy.reshape(HW, 1).astype(jnp.float32) + 0.5
    y = y * 2.0 / target_height - 1.0
    x = x * 2.0 / target_width - 1.0
    target_coordinate = jnp.concatenate([x, y], axis=1)            # (HW, 2)

    tcpr = compute_partial_repr(target_coordinate, ctrl)            # (HW, N)
    target_coordinate_repr = jnp.concatenate(
        [tcpr, jnp.ones((HW, 1), jnp.float32), target_coordinate], axis=1
    )                                                                # (HW, N+3)
    return inverse_kernel, target_coordinate_repr


def _round_up(x, m):
    return ((x + m - 1) // m) * m


def prepare_tps_pallas_constants(inverse_kernel, target_coordinate_repr,
                                 lane_tile_max=2048):
    """Fold and pad the __init__ constants ONCE (outside the jitted forward).

    Returns:
      a_t_pad    : (Kp, HWP) float32 — padded, transposed, fused constant
                   A^T where A = target_coordinate_repr @ inverse_kernel.
      hw         : number of valid output coordinates (HW)
      lane_tile  : lane-axis tile size used by the Pallas grid (divides HWP)
    """
    HW, Np3 = target_coordinate_repr.shape
    assert inverse_kernel.shape == (Np3, Np3)

    # Fuse the two forward matmuls into one constant: out_b = A @ Y_b.
    A = jnp.dot(target_coordinate_repr, inverse_kernel,
                preferred_element_type=jnp.float32)                  # (HW, N+3)

    Kp = _round_up(Np3, 8)                     # sublane-align contraction dim
    hw128 = _round_up(HW, 128)                 # lane-align output dim
    lane_tile = hw128 if hw128 <= lane_tile_max else lane_tile_max
    HWP = _round_up(HW, lane_tile)

    a_t_pad = jnp.zeros((Kp, HWP), jnp.float32).at[:Np3, :HW].set(A.T)
    return a_t_pad, HW, lane_tile


# ---------------------------------------------------------------------------
# Pallas kernel: single fused matmul, lane-dense HW output axis
# ---------------------------------------------------------------------------
def _tps_kernel(lhs_ref, a_t_ref, out_ref):
    # (ROWS, Kp) @ (Kp, TILE_HW) -> (ROWS, TILE_HW), f32 accumulation on MXU.
    out_ref[...] = jnp.dot(lhs_ref[...], a_t_ref[...],
                           preferred_element_type=jnp.float32)


@functools.partial(jax.jit, static_argnames=("hw", "lane_tile"))
def tps_forward(source_control_points, a_t_pad, *, hw, lane_tile):
    """Pallas implementation of TPSGridGen.forward.

    source_control_points : (B, N, 2) float32
    a_t_pad               : (Kp, HWP) padded fused constant (from init)
    returns               : (B, HW, 2) float32
    """
    B, N, two = source_control_points.shape
    assert two == 2
    Kp, HWP = a_t_pad.shape
    assert HWP % lane_tile == 0

    # Pack all batches into the sublane axis: row 2b = x-coords of batch b,
    # row 2b+1 = y-coords.  The 3 TPS padding rows of Y and the Kp padding
    # columns are zeros -> mathematically inert.
    ROWS = _round_up(B * 2, 8)
    scp_t = source_control_points.astype(jnp.float32).transpose(0, 2, 1)
    lhs = jnp.zeros((ROWS, Kp), jnp.float32).at[:B * 2, :N].set(
        scp_t.reshape(B * 2, N))

    grid = (HWP // lane_tile,)
    out_pad = pl.pallas_call(
        _tps_kernel,
        out_shape=jax.ShapeDtypeStruct((ROWS, HWP), jnp.float32),
        grid_spec=pltpu.PrefetchScalarGridSpec(
            num_scalar_prefetch=0,
            grid=grid,
            in_specs=[
                pl.BlockSpec((ROWS, Kp), lambda j: (0, 0)),        # packed Y^T
                pl.BlockSpec((Kp, lane_tile), lambda j: (0, j)),   # fused A^T
            ],
            out_specs=pl.BlockSpec((ROWS, lane_tile), lambda j: (0, j)),
        ),
        compiler_params=pltpu.CompilerParams(
            dimension_semantics=("parallel",),   # HW tiles shard across TCs
        ),
    )(lhs, a_t_pad)

    # (ROWS, HWP) -> (B*2, HW) -> (B, HW, 2)
    out = out_pad[:B * 2, :hw].reshape(B, 2, hw).transpose(0, 2, 1)
    return out


# ---------------------------------------------------------------------------
# Demo / self-test
# ---------------------------------------------------------------------------
if __name__ == "__main__":
    key = jax.random.PRNGKey(0)

    # Module config: 16x16 target grid, 4x4 control-point lattice (N = 16).
    target_height, target_width = 16, 16
    lin = jnp.linspace(-0.9, 0.9, 4)
    gx, gy = jnp.meshgrid(lin, lin, indexing="xy")
    target_control_points = jnp.stack(
        [gx.reshape(-1), gy.reshape(-1)], axis=1).astype(jnp.float32)  # (16, 2)

    inverse_kernel, target_coordinate_repr = build_tps_constants(
        target_height, target_width, target_control_points)

    # One-time constant fusion + padding (hoisted out of the forward).
    a_t_pad, hw, lane_tile = prepare_tps_pallas_constants(
        inverse_kernel, target_coordinate_repr)
    a_t_pad = jax.block_until_ready(a_t_pad)

    # Forward input: batch of perturbed control points, shape (B, N, 2).
    B, N = 2, target_control_points.shape[0]
    noise = 0.05 * jax.random.normal(key, (B, N, 2), dtype=jnp.float32)
    source_control_points = target_control_points[None, :, :] + noise

    out = tps_forward(source_control_points, a_t_pad, hw=hw,
                      lane_tile=lane_tile)
    jax.block_until_ready(out)

    # Pure-JAX reference of the original (unfused) forward pass.
    Y_ref = jnp.concatenate(
        [source_control_points, jnp.zeros((B, 3, 2), jnp.float32)], axis=1)
    mapping_ref = jnp.einsum("ij,bjk->bik", inverse_kernel, Y_ref)
    ref = jnp.einsum("hj,bjk->bhk", target_coordinate_repr, mapping_ref)

    assert out.shape == (B, target_height * target_width, 2), out.shape
    assert jnp.allclose(out, ref, atol=1e-4, rtol=1e-4), (
        float(jnp.max(jnp.abs(out - ref))))

    print("KERNEL_OK")
</pallas_src>

<mosaic_0001>
module attributes {stable_mosaic.version = 11 : i64} {
  func.func @_tps_kernel(%arg0: i32, %arg1: memref<8x24xf32, #tpu.memory_space<vmem>>, %arg2: memref<24x256xf32, #tpu.memory_space<vmem>>, %arg3: memref<8x256xf32, #tpu.memory_space<vmem>>) attributes {dimension_semantics = [#tpu.dimension_semantics<parallel>], iteration_bounds = array<i64: 1>, scalar_prefetch = 0 : i64, scratch_operands = 0 : i64, tpu.core_type = #tpu.core_type<tc>, window_params = [{pipeline_mode = #tpu.pipeline_mode<synchronous>, transform_indices = @transform_0, window_bounds = array<i64: 8, 24>}, {transform_indices = @transform_1, window_bounds = array<i64: 24, 256>}, {transform_indices = @transform_2, window_bounds = array<i64: 8, 256>}]} {
    %c0 = arith.constant 0 : index
    %c0_0 = arith.constant 0 : index
    %0 = vector.load %arg1[%c0, %c0_0] : memref<8x24xf32, #tpu.memory_space<vmem>>, vector<8x24xf32>
    %c0_1 = arith.constant 0 : index
    %c0_2 = arith.constant 0 : index
    %1 = vector.load %arg2[%c0_1, %c0_2] : memref<24x256xf32, #tpu.memory_space<vmem>>, vector<24x256xf32>
    %cst = arith.constant dense<0.000000e+00> : vector<8x256xf32>
    %2 = tpu.matmul %0, %1, %cst {dimension_numbers = #tpu.dot_dimension_numbers<[1], [0], [0], [1], [0, 0, 1, 1], [], []>} : vector<8x24xf32>, vector<24x256xf32>, vector<8x256xf32> -> vector<8x256xf32>
    %c0_3 = arith.constant 0 : index
    %c0_4 = arith.constant 0 : index
    %3 = vector.load %arg3[%c0_3, %c0_4] : memref<8x256xf32, #tpu.memory_space<vmem>>, vector<8x256xf32>
    tpu.vector_store %arg3[%c0_3, %c0_4], %2 {strides = array<i32>} : memref<8x256xf32, #tpu.memory_space<vmem>>, vector<8x256xf32>,
    return
  }
  func.func @transform_0(%arg0: i32) -> (i32, i32) {
    %c0_i32 = arith.constant 0 : i32
    %c0_i32_0 = arith.constant 0 : i32
    %c0_i32_1 = arith.constant 0 : i32
    return %c0_i32, %c0_i32_0 : i32, i32
  }
  func.func @transform_1(%arg0: i32) -> (i32, i32) {
    %c0_i32 = arith.constant 0 : i32
    %c0_i32_0 = arith.constant 0 : i32
    return %c0_i32, %arg0 : i32, i32
  }
  func.func @transform_2(%arg0: i32) -> (i32, i32) {
    %c0_i32 = arith.constant 0 : i32
    %c0_i32_0 = arith.constant 0 : i32
    return %c0_i32, %arg0 : i32, i32
  }
}

</mosaic_0001>

<llo_original>
// kernel: tps_forward.1
$region0: #{tps_forward.1}
  #allocation0 [shape = 'u32[]', space=smem, size = 0x4, offset = 0x4, fixed_abs, tag = 'smem constant byte address 0x4 - core index']
  #allocation1 [shape = 'u32[72,128]{1,0:T(1,128)}', space=vmem, size = 0x9000, scoped, tag = 'internal scratch']
  %s0 = inlined_call_operand.vmem [shape: f32[8,24], index: 0, kind: input, shape index: {}]
  %s1 = inlined_call_operand.hbm [shape: f32[24,256], index: 1, kind: input, shape index: {}]
  %s2 = inlined_call_operand.vmem [shape: f32[8,256], index: 2, kind: output, shape index: {}]
  %s3 = sld [smem:[#allocation0]]
  $region22: #{tps_forward.1} parent=0
    _
  %s5 = ssub.s32 1, %s3
  %s6 = scalar_select 0, %s5, %s3
  $region1: #{tps_forward.1} parent=0
    #allocation2 [shape = 'u8[24576]{0}', space=vmem, size = 0x6000, scoped, tag = 'input window, operand 1, single buffered']
    #allocation3 [shape = 's32[1]{0}', space=sflag, size = 0x4, scoped, tag = 'scoped memory for tps_forward.1']
    %7 = vsyncpa [#allocation3], 0
    // Predicated region
    $region2: #{tps_forward.1} parent=1 // pred_check
      _
    $region3: #{tps_forward.1} parent=1 // pred_check_branch
      %9 = sbr.rel (0) target = $region5
    $region4: #{tps_forward.1} parent=1 // pred_region
      _
    $region5: #{tps_forward.1} parent=1 // pred_fallthru
      _
    // Predicated region
    $region6: #{tps_forward.1} parent=1 // pred_check
      _
    $region7: #{tps_forward.1} parent=1 // pred_check_branch
      %11 = sbr.rel (0) target = $region9
    $region8: #{tps_forward.1} parent=1 // pred_region
      %13 = vsyncadd [#allocation3], 0
      %s14 = sshll.u32 %s1, 4
      %s15 = int_to_ptr.hbm [resolvable:$true] %s14
      %s16 = sshll.u32 [#allocation2], 4
      %s17 = int_to_ptr.vmem [resolvable:$true] %s16
      %22 = dma.hbm_to_vmem [thread:$0]  %s15, 768, %s17, [#allocation3], 256, 256, 16
    $region9: #{tps_forward.1} parent=1 // pred_fallthru
      _
    // Predicated region
    $region10: #{tps_forward.1} parent=1 // pred_check
      _
    $region11: #{tps_forward.1} parent=1 // pred_check_branch
      %24 = sbr.rel (0) target = $region13
    $region12: #{tps_forward.1} parent=1 // pred_region
      %26 = dma.done [#allocation3], 768
    $region13: #{tps_forward.1} parent=1 // pred_fallthru
      _
    %v27 = vld [vmem:[%s0] sm:$0xff]
    %v28 = vld [vmem:[#allocation2] sm:$0xff]
    %v29 = vld [vmem:[#allocation2 + $0x8] sm:$0xff]
    %v30 = vld [vmem:[#allocation2 + $0x10] sm:$0xff]
    %v31 = vld [vmem:[#allocation2 + $0x18] sm:$0xff]
    %v32 = vld [vmem:[#allocation2 + $0x20] sm:$0xff]
    %v33 = vld [vmem:[#allocation2 + $0x28] sm:$0xff]
    %vm34 = vcmask 195584
    %v36 = vsel %vm34, %v27, 0
    %38 = vmatpush.msra.mxu0 0.0
    %39 = vmatpush.msra.mxu0 0.0
    %40 = vmatpush.msra.mxu0 0.0
    %41 = vmatpush.msra.mxu0 0.0
    %42 = vmatpush.msra.mxu0 0.0
    %43 = vmatpush.msra.mxu0 0.0
    %44 = vmatpush.msra.mxu0 0.0
    %45 = vmatpush.msra.mxu0 0.0
    %46 = vmatpush.msra.mxu0 0.0
    %47 = vmatpush.msra.mxu0 0.0
    %48 = vmatpush.msra.mxu0 0.0
    %49 = vmatpush.msra.mxu0 0.0
    %50 = vmatpush.msra.mxu0 0.0
    %51 = vmatpush.msra.mxu0 %v32
    %52 = vmatpush.msra.mxu0 %v30
    %53 = vmatpush.msra.mxu0 %v28
    %54 = vmatmul.f32.gmra.mxu0 %v36
    %v55 = vpop.f32.mrf.mxu0
    %v56 = vadd.f32 0.0, %v55
    %57 = vdwg.mxu0
    %58 = vmatpush.msra.mxu0 0.0
    %59 = vmatpush.msra.mxu0 0.0
    %60 = vmatpush.msra.mxu0 0.0
    %61 = vmatpush.msra.mxu0 0.0
    %62 = vmatpush.msra.mxu0 0.0
    %63 = vmatpush.msra.mxu0 0.0
    %64 = vmatpush.msra.mxu0 0.0
    %65 = vmatpush.msra.mxu0 0.0
    %66 = vmatpush.msra.mxu0 0.0
    %67 = vmatpush.msra.mxu0 0.0
    %68 = vmatpush.msra.mxu0 0.0
    %69 = vmatpush.msra.mxu0 0.0
    %70 = vmatpush.msra.mxu0 0.0
    %71 = vmatpush.msra.mxu0 %v33
    %72 = vmatpush.msra.mxu0 %v31
    %73 = vmatpush.msra.mxu0 %v29
    %74 = vmatmul.f32.gmra.mxu0 %v36
    %v75 = vpop.f32.mrf.mxu0
    %v76 = vadd.f32 0.0, %v75
    %77 = vdwg.mxu0
    %78 = vst [vmem:[%s2] sm:$0xff] %v56
    %79 = vst [vmem:[%s2 + $0x8] sm:$0xff] %v76
    // Predicated region
    $region14: #{tps_forward.1} parent=1 // pred_check
      _
    $region15: #{tps_forward.1} parent=1 // pred_check_branch
      %81 = sbr.rel (0) target = $region17
    $region16: #{tps_forward.1} parent=1 // pred_region
      _
    $region17: #{tps_forward.1} parent=1 // pred_fallthru
      _
    // Predicated region
    $region18: #{tps_forward.1} parent=1 // pred_check
      _
    $region19: #{tps_forward.1} parent=1 // pred_check_branch
      %83 = sbr.rel (0) target = $region21
    $region20: #{tps_forward.1} parent=1 // pred_region
      _
    $region21: #{tps_forward.1} parent=1 // pred_fallthru
      _
    %84 = vsyncpa [#allocation3], 1

</llo_original>
